<compile_context>
chip_gen: v7x
topology: tpu7x:2x2x1
jax: 0.10.0
libtpu: 0.0.40
codegen_flags: <defaults>
</compile_context>

<pallas_src>
import jax
import jax.numpy as jnp
from jax.experimental import pallas as pl
from jax.experimental.pallas import tpu as pltpu

IN_DIM = 180
H1, H2, OUT_DIM = 10, 4, 1


def _round_up(x, m):
    return ((x + m - 1) // m) * m


def _tile_rows_target():
    """Generation-dependent row tile: ~8192 on v6e/v7x, 4096 elsewhere."""
    try:
        kind = jax.devices()[0].device_kind.lower()
    except Exception:
        kind = ""
    if ("v6" in kind) or ("v7" in kind) or ("7x" in kind):
        return 8192
    return 4096  # v5e / unknown: ~91% of roofline already, comfortable VMEM


def fused_affine_sigmoid_kernel(x_ref, w_ref, b_ref, o_ref):
    # (tm, 180) tile: rows on sublanes, features on lanes.  Upcast in VMEM so a
    # non-f32 x stream never gets a wrapper-side HBM copy.
    x = x_ref[...].astype(jnp.float32)

    # Whole (ReLU-free) Linear stack fused into one matvec; MXU column
    # utilisation is irrelevant because the kernel is HBM-bound on x.
    logits = jnp.dot(x, w_ref[...], preferred_element_type=jnp.float32) + b_ref[...]
    probs = jax.nn.sigmoid(logits)                         # (tm, 1) sublane-major

    # Relayout (tm, 1) -> lane-dense (tm//128, 128): per 128-row group, mask
    # against the identity pattern and reduce over sublanes.  jnp.where (not a
    # multiply) keeps NaN/Inf garbage from a partial last x block confined to
    # its own (discarded) output element.
    row = jax.lax.broadcasted_iota(jnp.int32, (128, 128), 0)
    col = jax.lax.broadcasted_iota(jnp.int32, (128, 128), 1)
    eye = row == col
    for g in range(o_ref.shape[0]):                        # tm // 128 groups (static)
        p_g = probs[g * 128:(g + 1) * 128, :]              # (128, 1)
        o_ref[g, :] = jnp.sum(jnp.where(eye, p_g, 0.0), axis=0).astype(o_ref.dtype)


def _fuse_affine(params):
    """Collapse Linear(180,10)->Linear(10,4)->Linear(4,1) (PyTorch (out,in)
    weights) into x @ w_eff + b_eff. Exact in math; f32 rounding differs
    slightly from the layer-by-layer reference."""
    w1, b1, w2, b2, w3, b3 = params
    w_eff = (w1.T @ w2.T @ w3.T).astype(jnp.float32)                      # (180, 1)
    b_eff = (b1 @ w2.T @ w3.T + b2 @ w3.T + b3).astype(jnp.float32)       # (1,)
    return w_eff, b_eff.reshape(1, 1)


def neural_network_2d_forward(x, params, tile_rows=None):
    """Forward of NeuralNetwork_2d.  x: (B, ...) with prod(trailing dims)==180.
    params: PyTorch-layout (w1(10,180), b1(10), w2(4,10), b2(4), w3(1,4), b3(1)).
    Returns (B, 1) float32."""
    B = x.shape[0]
    xf = x.reshape(B, -1)                  # nn.Flatten(); NO wrapper astype.
    M, F = xf.shape
    assert F == IN_DIM, f"flattened feature dim {F} != {IN_DIM}"

    w_eff, b_eff = _fuse_affine(params)

    tm_target = _round_up(int(tile_rows), 1024) if tile_rows else _tile_rows_target()
    if M <= 128:
        tm = 128                                             # single tiny tile
    else:
        # >=4 grid steps for large M; multiple of 1024 so the lane-dense output
        # block keeps a sublane dim that is a multiple of 8.
        tm = min(tm_target, max(1024, _round_up(-(-M // 4), 1024)))

    if M < tm:
        # Only inputs smaller than one tile are padded (bounded, tiny cost);
        # large inputs are never re-copied in HBM -- Pallas handles the partial
        # last block of the cdiv grid.
        xf = jnp.pad(xf, ((0, tm - M), (0, 0)))

    rows = xf.shape[0]
    num_tiles = pl.cdiv(rows, tm)
    out_rows = num_tiles * (tm // 128)

    out = pl.pallas_call(
        fused_affine_sigmoid_kernel,
        out_shape=jax.ShapeDtypeStruct((out_rows, 128), jnp.float32),
        grid=(num_tiles,),
        in_specs=[
            pl.BlockSpec((tm, IN_DIM), lambda i: (i, 0)),    # streamed x tiles
            pl.BlockSpec((IN_DIM, OUT_DIM), lambda i: (0, 0)),  # resident w_eff
            pl.BlockSpec((1, 1), lambda i: (0, 0)),             # resident b_eff
        ],
        out_specs=pl.BlockSpec((tm // 128, 128), lambda i: (i, 0)),
        compiler_params=pltpu.CompilerParams(
            dimension_semantics=("parallel",),   # megacore split on v7x
            vmem_limit_bytes=48 * 1024 * 1024,   # tm=8192 peaks ~21 MiB live
        ),
    )(xf, w_eff, b_eff)

    # Lane-dense (out_rows, 128) -> (B, 1); flat order == global row order.
    return out.reshape(-1)[:M].reshape(M, 1)


def init_params(key):
    """PyTorch-layout params with nn.Linear's default U(+-1/sqrt(fan_in)) init."""
    keys = jax.random.split(key, 6)

    def linear(kw, kb, fan_in, fan_out):
        bound = 1.0 / (fan_in ** 0.5)
        w = jax.random.uniform(kw, (fan_out, fan_in), jnp.float32, -bound, bound)
        b = jax.random.uniform(kb, (fan_out,), jnp.float32, -bound, bound)
        return w, b

    w1, b1 = linear(keys[0], keys[1], IN_DIM, H1)
    w2, b2 = linear(keys[2], keys[3], H1, H2)
    w3, b3 = linear(keys[4], keys[5], H2, OUT_DIM)
    return (w1, b1, w2, b2, w3, b3)


def reference_forward(x, params):
    """Layer-by-layer JAX reference matching the PyTorch module exactly."""
    w1, b1, w2, b2, w3, b3 = params
    xf = x.reshape(x.shape[0], -1)
    h1 = xf @ w1.T + b1            # Linear(180, 10)   (no ReLU in the module)
    h2 = h1 @ w2.T + b2            # Linear(10, 4)
    logits = h2 @ w3.T + b3        # Linear(4, 1)
    return jax.nn.sigmoid(logits)


if __name__ == "__main__":
    key = jax.random.PRNGKey(0)
    k_x, k_p = jax.random.split(key)

    # 2-D per-example input: (batch=16, 12, 15); nn.Flatten() -> (16, 180).
    x = jax.random.normal(k_x, (16, 12, 15), dtype=jnp.float32)
    params = init_params(k_p)

    out = jax.block_until_ready(neural_network_2d_forward(x, params))
    ref = reference_forward(x, params)

    assert out.shape == (16, 1), out.shape
    # Slightly loose tolerance: the fused affine map is exact in math but
    # re-associates the f32 reductions vs. the layer-by-layer reference.
    assert jnp.allclose(out, ref, atol=1e-5, rtol=1e-4), "mismatch vs JAX reference"

    print("KERNEL_OK")
</pallas_src>

<mosaic_0001>
module attributes {stable_mosaic.version = 11 : i64} {
  func.func @fused_affine_sigmoid_kernel(%arg0: i32, %arg1: memref<128x180xf32, #tpu.memory_space<vmem>>, %arg2: memref<180x1xf32, #tpu.memory_space<vmem>>, %arg3: memref<1x1xf32, #tpu.memory_space<vmem>>, %arg4: memref<1x128xf32, #tpu.memory_space<vmem>>) attributes {dimension_semantics = [#tpu.dimension_semantics<parallel>], iteration_bounds = array<i64: 1>, scalar_prefetch = 0 : i64, scratch_operands = 0 : i64, tpu.core_type = #tpu.core_type<tc>, window_params = [{transform_indices = @transform_0, window_bounds = array<i64: 128, 180>}, {pipeline_mode = #tpu.pipeline_mode<synchronous>, transform_indices = @transform_1, window_bounds = array<i64: 180, 1>}, {pipeline_mode = #tpu.pipeline_mode<synchronous>, transform_indices = @transform_2, window_bounds = array<i64: 1, 1>}, {transform_indices = @transform_3, window_bounds = array<i64: 1, 128>}]} {
    %c0 = arith.constant 0 : index
    %c0_0 = arith.constant 0 : index
    %0 = vector.load %arg1[%c0, %c0_0] : memref<128x180xf32, #tpu.memory_space<vmem>>, vector<128x180xf32>
    %c0_1 = arith.constant 0 : index
    %c0_2 = arith.constant 0 : index
    %1 = vector.load %arg2[%c0_1, %c0_2] : memref<180x1xf32, #tpu.memory_space<vmem>>, vector<180x1xf32>
    %cst = arith.constant dense<0.000000e+00> : vector<128x1xf32>
    %2 = tpu.matmul %0, %1, %cst {dimension_numbers = #tpu.dot_dimension_numbers<[1], [0], [0], [1], [0, 0, 1, 1], [], []>} : vector<128x180xf32>, vector<180x1xf32>, vector<128x1xf32> -> vector<128x1xf32>
    %c0_3 = arith.constant 0 : index
    %c0_4 = arith.constant 0 : index
    %3 = vector.load %arg3[%c0_3, %c0_4] : memref<1x1xf32, #tpu.memory_space<vmem>>, vector<1x1xf32>
    %4 = vector.broadcast %3 : vector<1x1xf32> to vector<128x1xf32>
    %5 = arith.addf %2, %4 : vector<128x1xf32>
    %6 = arith.negf %5 : vector<128x1xf32>
    %7 = math.exp %6 : vector<128x1xf32>
    %cst_5 = arith.constant 1.000000e+00 : f32
    %8 = vector.broadcast %cst_5 : f32 to vector<128x1xf32>
    %9 = arith.addf %8, %7 : vector<128x1xf32>
    %10 = arith.divf %8, %9 : vector<128x1xf32>
    %11 = tpu.iota {dimensions = array<i32: 0>} : vector<128x128xi32>
    %12 = tpu.iota {dimensions = array<i32: 1>} : vector<128x128xi32>
    %13 = arith.cmpi eq, %11, %12 : vector<128x128xi32>
    %cst_6 = arith.constant 0.000000e+00 : f32
    %14 = vector.shape_cast %10 : vector<128x1xf32> to vector<128x1xf32>
    %15 = vector.broadcast %14 : vector<128x1xf32> to vector<128x128xf32>
    %16 = vector.broadcast %cst_6 : f32 to vector<128x128xf32>
    %17 = arith.select %13, %15, %16 : vector<128x128xi1>, vector<128x128xf32>
    %cst_7 = arith.constant dense<0.000000e+00> : vector<128xf32>
    %18 = vector.multi_reduction <add>, %17, %cst_7 [0] : vector<128x128xf32> to vector<128xf32>
    %c0_8 = arith.constant 0 : index
    %c0_9 = arith.constant 0 : index
    %19 = vector.load %arg4[%c0_8, %c0_9] : memref<1x128xf32, #tpu.memory_space<vmem>>, vector<1x128xf32>
    %20 = vector.shape_cast %19 : vector<1x128xf32> to vector<128xf32>
    %21 = vector.shape_cast %18 : vector<128xf32> to vector<1x128xf32>
    tpu.vector_store %arg4[%c0_8, %c0_9], %21 {strides = array<i32>} : memref<1x128xf32, #tpu.memory_space<vmem>>, vector<1x128xf32>,
    return
  }
  func.func @transform_0(%arg0: i32) -> (i32, i32) {
    %c0_i32 = arith.constant 0 : i32
    %c0_i32_0 = arith.constant 0 : i32
    return %arg0, %c0_i32 : i32, i32
  }
  func.func @transform_1(%arg0: i32) -> (i32, i32) {
    %c0_i32 = arith.constant 0 : i32
    %c0_i32_0 = arith.constant 0 : i32
    %c0_i32_1 = arith.constant 0 : i32
    return %c0_i32, %c0_i32_0 : i32, i32
  }
  func.func @transform_2(%arg0: i32) -> (i32, i32) {
    %c0_i32 = arith.constant 0 : i32
    %c0_i32_0 = arith.constant 0 : i32
    %c0_i32_1 = arith.constant 0 : i32
    return %c0_i32, %c0_i32_0 : i32, i32
  }
  func.func @transform_3(%arg0: i32) -> (i32, i32) {
    %c0_i32 = arith.constant 0 : i32
    %c0_i32_0 = arith.constant 0 : i32
    return %arg0, %c0_i32 : i32, i32
  }
}

</mosaic_0001>

<llo_original>
// kernel: tpu_custom_call.1
$region0: #{tpu_custom_call.1}
  #allocation0 [shape = 'u32[]', space=smem, size = 0x4, offset = 0x4, fixed_abs, tag = 'smem constant byte address 0x4 - core index']
  #allocation1 [shape = 'u32[144,128]{1,0:T(1,128)}', space=vmem, size = 0x12000, scoped, tag = 'internal scratch']
  #allocation2 [shape = 'f32[1,1]{1,0:T(1,128)S(1)}', space=vmem, size = 0x200, scoped, tag = 'scoped memory for tpu_custom_call.1']
  %s0 = inlined_call_operand.vmem [shape: f32[128,180], index: 0, kind: input, shape index: {}]
  %s1 = inlined_call_operand.vmem [shape: f32[180,1], index: 1, kind: input, shape index: {}]
  %s2 = inlined_call_operand.<no memory space> [shape: f32[1,1], index: 2, kind: input, shape index: {}]
  %s3 = inlined_call_operand.hbm [shape: f32[1,128], index: 3, kind: output, shape index: {}]
  %s4 = sld [smem:[#allocation0]]
  $region22: #{tpu_custom_call.1} parent=0
    _
  %s6 = ssub.s32 1, %s4
  %s7 = scalar_select 0, %s6, %s4
  %v8 = vstv %s2
  %9 = vst [vmem:[#allocation2] sm:$0x1] %v8
  $region1: #{tpu_custom_call.1} parent=0
    #allocation3 [shape = 'u8[512]{0}', space=vmem, size = 0x400, scoped, tag = 'output window, operand 0, single buffered']
    #allocation4 [shape = 's32[1]{0}', space=sflag, size = 0x4, scoped, tag = 'scoped memory for tpu_custom_call.1']
    %10 = vsyncpa [#allocation4], 0
    // Predicated region
    $region2: #{tpu_custom_call.1} parent=1 // pred_check
      _
    $region3: #{tpu_custom_call.1} parent=1 // pred_check_branch
      %12 = sbr.rel (0) target = $region5
    $region4: #{tpu_custom_call.1} parent=1 // pred_region
      _
    $region5: #{tpu_custom_call.1} parent=1 // pred_fallthru
      _
    // Predicated region
    $region6: #{tpu_custom_call.1} parent=1 // pred_check
      _
    $region7: #{tpu_custom_call.1} parent=1 // pred_check_branch
      %14 = sbr.rel (0) target = $region9
    $region8: #{tpu_custom_call.1} parent=1 // pred_region
      _
    $region9: #{tpu_custom_call.1} parent=1 // pred_fallthru
      _
    // Predicated region
    $region10: #{tpu_custom_call.1} parent=1 // pred_check
      _
    $region11: #{tpu_custom_call.1} parent=1 // pred_check_branch
      %16 = sbr.rel (0) target = $region13
    $region12: #{tpu_custom_call.1} parent=1 // pred_region
      _
    $region13: #{tpu_custom_call.1} parent=1 // pred_fallthru
      _
    %v17 = vld [vmem:[%s0] sm:$0xff]
    %v18 = vld [vmem:[%s0 + $0x8] sm:$0xff]
    %v19 = vld [vmem:[%s0 + $0x10] sm:$0xff]
    %v20 = vld [vmem:[%s0 + $0x18] sm:$0xff]
    %v21 = vld [vmem:[%s0 + $0x20] sm:$0xff]
    %v22 = vld [vmem:[%s0 + $0x28] sm:$0xff]
    %v23 = vld [vmem:[%s0 + $0x30] sm:$0xff]
    %v24 = vld [vmem:[%s0 + $0x38] sm:$0xff]
    %v25 = vld [vmem:[%s0 + $0x40] sm:$0xff]
    %v26 = vld [vmem:[%s0 + $0x48] sm:$0xff]
    %v27 = vld [vmem:[%s0 + $0x50] sm:$0xff]
    %v28 = vld [vmem:[%s0 + $0x58] sm:$0xff]
    %v29 = vld [vmem:[%s0 + $0x60] sm:$0xff]
    %v30 = vld [vmem:[%s0 + $0x68] sm:$0xff]
    %v31 = vld [vmem:[%s0 + $0x70] sm:$0xff]
    %v32 = vld [vmem:[%s0 + $0x78] sm:$0xff]
    %v33 = vld [vmem:[%s0 + $0x80] sm:$0xff]
    %v34 = vld [vmem:[%s0 + $0x88] sm:$0xff]
    %v35 = vld [vmem:[%s0 + $0x90] sm:$0xff]
    %v36 = vld [vmem:[%s0 + $0x98] sm:$0xff]
    %v37 = vld [vmem:[%s0 + $0xa0] sm:$0xff]
    %v38 = vld [vmem:[%s0 + $0xa8] sm:$0xff]
    %v39 = vld [vmem:[%s0 + $0xb0] sm:$0xff]
    %v40 = vld [vmem:[%s0 + $0xb8] sm:$0xff]
    %v41 = vld [vmem:[%s0 + $0xc0] sm:$0xff]
    %v42 = vld [vmem:[%s0 + $0xc8] sm:$0xff]
    %v43 = vld [vmem:[%s0 + $0xd0] sm:$0xff]
    %v44 = vld [vmem:[%s0 + $0xd8] sm:$0xff]
    %v45 = vld [vmem:[%s0 + $0xe0] sm:$0xff]
    %v46 = vld [vmem:[%s0 + $0xe8] sm:$0xff]
    %v47 = vld [vmem:[%s0 + $0xf0] sm:$0xff]
    %v48 = vld [vmem:[%s0 + $0xf8] sm:$0xff]
    %v49 = vld [vmem:[%s1] sm:$0xff]
    %v50 = vld [vmem:[%s1 + $0x8] sm:$0xff]
    %v51 = vld [vmem:[%s1 + $0x10] sm:$0xff]
    %v52 = vld [vmem:[%s1 + $0x18] sm:$0xff]
    %v53 = vld [vmem:[%s1 + $0x20] sm:$0xff]
    %v54 = vld [vmem:[%s1 + $0x28] sm:$0xff]
    %v55 = vld [vmem:[%s1 + $0x30] sm:$0xff]
    %v56 = vld [vmem:[%s1 + $0x38] sm:$0xff]
    %v57 = vld [vmem:[%s1 + $0x40] sm:$0xff]
    %v58 = vld [vmem:[%s1 + $0x48] sm:$0xff]
    %v59 = vld [vmem:[%s1 + $0x50] sm:$0xff]
    %v60 = vld [vmem:[%s1 + $0x58] sm:$0xff]
    %v61 = vld [vmem:[%s1 + $0x60] sm:$0xff]
    %v62 = vld [vmem:[%s1 + $0x68] sm:$0xff]
    %v63 = vld [vmem:[%s1 + $0x70] sm:$0xff]
    %v64 = vld [vmem:[%s1 + $0x78] sm:$0xff]
    %v65 = vld [vmem:[%s1 + $0x80] sm:$0xff]
    %v66 = vld [vmem:[%s1 + $0x88] sm:$0xff]
    %v67 = vld [vmem:[%s1 + $0x90] sm:$0xff]
    %v68 = vld [vmem:[%s1 + $0x98] sm:$0xff]
    %v69 = vld [vmem:[%s1 + $0xa0] sm:$0xff]
    %v70 = vld [vmem:[%s1 + $0xa8] sm:$0xff]
    %v71 = vld [vmem:[%s1 + $0xb0] sm:$0xf]
    %v72 = vld [vmem:[#allocation2] sm:$0x1]
    %v74 = vlaneseq
    %v75 = vshrl.u32 %v74, 7
    %v76 = vsub.s32 0, %v75
    %v77 = vrot.slane %v72, %v76
    %vm79 = vcmask 424960
    %v81 = vsel %vm79, %v18, 0
    %v84 = vsel %vm79, %v20, 0
    %v87 = vsel %vm79, %v22, 0
    %v90 = vsel %vm79, %v24, 0
    %v93 = vsel %vm79, %v26, 0
    %v96 = vsel %vm79, %v28, 0
    %v99 = vsel %vm79, %v30, 0
    %v102 = vsel %vm79, %v32, 0
    %v105 = vsel %vm79, %v34, 0
    %v108 = vsel %vm79, %v36, 0
    %v111 = vsel %vm79, %v38, 0
    %v114 = vsel %vm79, %v40, 0
    %v117 = vsel %vm79, %v42, 0
    %v120 = vsel %vm79, %v44, 0
    %v123 = vsel %vm79, %v46, 0
    %v126 = vsel %vm79, %v48, 0
    %vm128 = vcmask 1043456
    %v130 = vsel %vm128, %v71, 0
    %132 = vmatprep.subr.mxu0 0.0
    %133 = vmatpush1.msra.mxu0 %v49
    %134 = vmatprep.subr.mxu0 0.0
    %135 = vmatpush1.msra.mxu0 %v50
    %136 = vmatprep.subr.mxu0 0.0
    %137 = vmatpush1.msra.mxu0 %v51
    %138 = vmatprep.subr.mxu0 0.0
    %139 = vmatpush1.msra.mxu0 %v52
    %140 = vmatprep.subr.mxu0 0.0
    %141 = vmatpush1.msra.mxu0 %v53
    %142 = vmatprep.subr.mxu0 0.0
    %143 = vmatpush1.msra.mxu0 %v54
    %144 = vmatprep.subr.mxu0 0.0
    %145 = vmatpush1.msra.mxu0 %v55
    %146 = vmatprep.subr.mxu0 0.0
    %147 = vmatpush1.msra.mxu0 %v56
    %148 = vmatprep.subr.mxu0 0.0
    %149 = vmatpush1.msra.mxu0 %v57
    %150 = vmatprep.subr.mxu0 0.0
    %151 = vmatpush1.msra.mxu0 %v58
    %152 = vmatprep.subr.mxu0 0.0
    %153 = vmatpush1.msra.mxu0 %v59
    %154 = vmatprep.subr.mxu0 0.0
    %155 = vmatpush1.msra.mxu0 %v60
    %156 = vmatprep.subr.mxu0 0.0
    %157 = vmatpush1.msra.mxu0 %v61
    %158 = vmatprep.subr.mxu0 0.0
    %159 = vmatpush1.msra.mxu0 %v62
    %160 = vmatprep.subr.mxu0 0.0
    %161 = vmatpush1.msra.mxu0 %v63
    %162 = vmatprep.subr.mxu0 0.0
    %163 = vmatpush1.msra.mxu0 %v64
    %164 = vmatprep.subr.mxu0 0.0
    %165 = vmatpush1.msra.mxu0 %v65
    %166 = vmatprep.subr.mxu0 0.0
    %167 = vmatpush1.msra.mxu0 %v66
    %168 = vmatprep.subr.mxu0 0.0
    %169 = vmatpush1.msra.mxu0 %v67
    %170 = vmatprep.subr.mxu0 0.0
    %171 = vmatpush1.msra.mxu0 %v68
    %172 = vmatprep.subr.mxu0 0.0
    %173 = vmatpush1.msra.mxu0 %v69
    %174 = vmatprep.subr.mxu0 0.0
    %175 = vmatpush1.msra.mxu0 %v70
    %176 = vmatprep.subr.mxu0 0.0
    %177 = vmatpush1.msra.mxu0 %v130
    %178 = vmatprep.subr.mxu0 0.0
    %179 = vmatpush1.msra.mxu0 0.0
    %180 = vmatprep.subr.mxu0 0.0
    %181 = vmatpush1.msra.mxu0 0.0
    %182 = vmatprep.subr.mxu0 0.0
    %183 = vmatpush1.msra.mxu0 0.0
    %184 = vmatprep.subr.mxu0 0.0
    %185 = vmatpush1.msra.mxu0 0.0
    %186 = vmatprep.subr.mxu0 0.0
    %187 = vmatpush1.msra.mxu0 0.0
    %188 = vmatprep.subr.mxu0 0.0
    %189 = vmatpush1.msra.mxu0 0.0
    %190 = vmatprep.subr.mxu0 0.0
    %191 = vmatpush1.msra.mxu0 0.0
    %192 = vmatprep.subr.mxu0 0.0
    %193 = vmatpush1.msra.mxu0 0.0
    %194 = vmatprep.subr.mxu0 0.0
    %195 = vmatpush1.msra.mxu0 0.0
    %196 = vmatprep.mubr.f32.mxu0 %v81
    %197 = vmatmul.mubr.f32.gmra.mrb[0].mxu0 %v17
    %v198 = vpop.f32.mrb[0].mxu0
    %v199 = vadd.f32 %v77, %v198
    %v200 = vpop.f32.mrb[0].mxu0
    %201 = vmatprep.mubr.f32.mxu0 %v84
    %202 = vmatmul.mubr.f32.gmra.mrb[0].mxu0 %v19
    %v203 = vpop.f32.mrb[0].mxu0
    %v204 = vadd.f32 %v77, %v203
    %v205 = vpop.f32.mrb[0].mxu0
    %206 = vmatprep.mubr.f32.mxu0 %v87
    %207 = vmatmul.mubr.f32.gmra.mrb[0].mxu0 %v21
    %v208 = vpop.f32.mrb[0].mxu0
    %v209 = vadd.f32 %v77, %v208
    %v210 = vpop.f32.mrb[0].mxu0
    %211 = vmatprep.mubr.f32.mxu0 %v90
    %212 = vmatmul.mubr.f32.gmra.mrb[0].mxu0 %v23
    %v213 = vpop.f32.mrb[0].mxu0
    %v214 = vadd.f32 %v77, %v213
    %v215 = vpop.f32.mrb[0].mxu0
    %216 = vmatprep.mubr.f32.mxu0 %v93
    %217 = vmatmul.mubr.f32.gmra.mrb[0].mxu0 %v25
    %v218 = vpop.f32.mrb[0].mxu0
    %v219 = vadd.f32 %v77, %v218
    %v220 = vpop.f32.mrb[0].mxu0
    %221 = vmatprep.mubr.f32.mxu0 %v96
    %222 = vmatmul.mubr.f32.gmra.mrb[0].mxu0 %v27
    %v223 = vpop.f32.mrb[0].mxu0
    %v224 = vadd.f32 %v77, %v223
    %v225 = vpop.f32.mrb[0].mxu0
    %226 = vmatprep.mubr.f32.mxu0 %v99
    %227 = vmatmul.mubr.f32.gmra.mrb[0].mxu0 %v29
    %v228 = vpop.f32.mrb[0].mxu0
    %v229 = vadd.f32 %v77, %v228
    %v230 = vpop.f32.mrb[0].mxu0
    %231 = vmatprep.mubr.f32.mxu0 %v102
    %232 = vmatmul.mubr.f32.gmra.mrb[0].mxu0 %v31
    %v233 = vpop.f32.mrb[0].mxu0
    %v234 = vadd.f32 %v77, %v233
    %v235 = vpop.f32.mrb[0].mxu0
    %236 = vmatprep.mubr.f32.mxu0 %v105
    %237 = vmatmul.mubr.f32.gmra.mrb[0].mxu0 %v33
    %v238 = vpop.f32.mrb[0].mxu0
    %v239 = vadd.f32 %v77, %v238
    %v240 = vpop.f32.mrb[0].mxu0
    %241 = vmatprep.mubr.f32.mxu0 %v108
    %242 = vmatmul.mubr.f32.gmra.mrb[0].mxu0 %v35
    %v243 = vpop.f32.mrb[0].mxu0
    %v244 = vadd.f32 %v77, %v243
    %v245 = vpop.f32.mrb[0].mxu0
    %246 = vmatprep.mubr.f32.mxu0 %v111
    %247 = vmatmul.mubr.f32.gmra.mrb[0].mxu0 %v37
    %v248 = vpop.f32.mrb[0].mxu0
    %v249 = vadd.f32 %v77, %v248
    %v250 = vpop.f32.mrb[0].mxu0
    %251 = vmatprep.mubr.f32.mxu0 %v114
    %252 = vmatmul.mubr.f32.gmra.mrb[0].mxu0 %v39
    %v253 = vpop.f32.mrb[0].mxu0
    %v254 = vadd.f32 %v77, %v253
    %v255 = vpop.f32.mrb[0].mxu0
    %256 = vmatprep.mubr.f32.mxu0 %v117
    %257 = vmatmul.mubr.f32.gmra.mrb[0].mxu0 %v41
    %v258 = vpop.f32.mrb[0].mxu0
    %v259 = vadd.f32 %v77, %v258
    %v260 = vpop.f32.mrb[0].mxu0
    %261 = vmatprep.mubr.f32.mxu0 %v120
    %262 = vmatmul.mubr.f32.gmra.mrb[0].mxu0 %v43
    %v263 = vpop.f32.mrb[0].mxu0
    %v264 = vadd.f32 %v77, %v263
    %v265 = vpop.f32.mrb[0].mxu0
    %266 = vmatprep.mubr.f32.mxu0 %v123
    %267 = vmatmul.mubr.f32.gmra.mrb[0].mxu0 %v45
    %v268 = vpop.f32.mrb[0].mxu0
    %v269 = vadd.f32 %v77, %v268
    %v270 = vpop.f32.mrb[0].mxu0
    %271 = vmatprep.mubr.f32.mxu0 %v126
    %272 = vmatmul.mubr.f32.gmra.mrb[0].mxu0 %v47
    %v273 = vpop.f32.mrb[0].mxu0
    %v274 = vadd.f32 %v77, %v273
    %v275 = vpop.f32.mrb[0].mxu0
    %276 = vdwg.mxu0
    %v277 = vxor.u32 %v199, 2147483648
    %v278 = vxor.u32 %v204, 2147483648
    %v279 = vxor.u32 %v209, 2147483648
    %v280 = vxor.u32 %v214, 2147483648
    %v281 = vxor.u32 %v219, 2147483648
    %v282 = vxor.u32 %v224, 2147483648
    %v283 = vxor.u32 %v229, 2147483648
    %v284 = vxor.u32 %v234, 2147483648
    %v285 = vxor.u32 %v239, 2147483648
    %v286 = vxor.u32 %v244, 2147483648
    %v287 = vxor.u32 %v249, 2147483648
    %v288 = vxor.u32 %v254, 2147483648
    %v289 = vxor.u32 %v259, 2147483648
    %v290 = vxor.u32 %v264, 2147483648
    %v291 = vxor.u32 %v269, 2147483648
    %v292 = vxor.u32 %v274, 2147483648
    %v293 = vmul.f32 %v277, 1.442695
    %v294 = vpow.pop %v293
    %v295 = vmul.f32 %v278, 1.442695
    %v296 = vpow.pop %v295
    %v297 = vmul.f32 %v279, 1.442695
    %v298 = vpow.pop %v297
    %v299 = vmul.f32 %v280, 1.442695
    %v300 = vpow.pop %v299
    %v301 = vmul.f32 %v281, 1.442695
    %v302 = vpow.pop %v301
    %v303 = vmul.f32 %v282, 1.442695
    %v304 = vpow.pop %v303
    %v305 = vmul.f32 %v283, 1.442695
    %v306 = vpow.pop %v305
    %v307 = vmul.f32 %v284, 1.442695
    %v308 = vpow.pop %v307
    %v309 = vmul.f32 %v285, 1.442695
    %v310 = vpow.pop %v309
    %v311 = vmul.f32 %v286, 1.442695
    %v312 = vpow.pop %v311
    %v313 = vmul.f32 %v287, 1.442695
    %v314 = vpow.pop %v313
    %v315 = vmul.f32 %v288, 1.442695
    %v316 = vpow.pop %v315
    %v317 = vmul.f32 %v289, 1.442695
    %v318 = vpow.pop %v317
    %v319 = vmul.f32 %v290, 1.442695
    %v320 = vpow.pop %v319
    %v321 = vmul.f32 %v291, 1.442695
    %v322 = vpow.pop %v321
    %v323 = vmul.f32 %v292, 1.442695
    %v324 = vpow.pop %v323
    %v325 = vadd.f32 %v294, 1.0
    %v326 = vadd.f32 %v296, 1.0
    %v327 = vadd.f32 %v298, 1.0
    %v328 = vadd.f32 %v300, 1.0
    %v329 = vadd.f32 %v302, 1.0
    %v330 = vadd.f32 %v304, 1.0
    %v331 = vadd.f32 %v306, 1.0
    %v332 = vadd.f32 %v308, 1.0
    %v333 = vadd.f32 %v310, 1.0
    %v334 = vadd.f32 %v312, 1.0
    %v335 = vadd.f32 %v314, 1.0
    %v336 = vadd.f32 %v316, 1.0
    %v337 = vadd.f32 %v318, 1.0
    %v338 = vadd.f32 %v320, 1.0
    %v339 = vadd.f32 %v322, 1.0
    %v340 = vadd.f32 %v324, 1.0
    %v341 = vrcp.pop %v325
    %v342 = vmul.f32 1.0, %v341
    %v343 = vrcp.pop %v326
    %v344 = vmul.f32 1.0, %v343
    %v345 = vrcp.pop %v327
    %v346 = vmul.f32 1.0, %v345
    %v347 = vrcp.pop %v328
    %v348 = vmul.f32 1.0, %v347
    %v349 = vrcp.pop %v329
    %v350 = vmul.f32 1.0, %v349
    %v351 = vrcp.pop %v330
    %v352 = vmul.f32 1.0, %v351
    %v353 = vrcp.pop %v331
    %v354 = vmul.f32 1.0, %v353
    %v355 = vrcp.pop %v332
    %v356 = vmul.f32 1.0, %v355
    %v357 = vrcp.pop %v333
    %v358 = vmul.f32 1.0, %v357
    %v359 = vrcp.pop %v334
    %v360 = vmul.f32 1.0, %v359
    %v361 = vrcp.pop %v335
    %v362 = vmul.f32 1.0, %v361
    %v363 = vrcp.pop %v336
    %v364 = vmul.f32 1.0, %v363
    %v365 = vrcp.pop %v337
    %v366 = vmul.f32 1.0, %v365
    %v367 = vrcp.pop %v338
    %v368 = vmul.f32 1.0, %v367
    %v369 = vrcp.pop %v339
    %v370 = vmul.f32 1.0, %v369
    %v371 = vrcp.pop %v340
    %v372 = vmul.f32 1.0, %v371
    %v373 = vlaneseq
    %v374 = vshrl.u32 %v373, 7
    %v375 = vadd.s32 %v374, 8
    %v376 = vadd.s32 %v374, 16
    %v377 = vadd.s32 %v374, 24
    %v378 = vadd.s32 %v374, 32
    %v379 = vadd.s32 %v374, 40
    %v380 = vadd.s32 %v374, 48
    %v381 = vadd.s32 %v374, 56
    %v382 = vadd.s32 %v374, 64
    %v383 = vadd.s32 %v374, 72
    %v384 = vadd.s32 %v374, 80
    %v385 = vadd.s32 %v374, 88
    %v386 = vadd.s32 %v374, 96
    %v387 = vadd.s32 %v374, 104
    %v388 = vadd.s32 %v374, 112
    %v389 = vadd.s32 %v374, 120
    %v390 = vlaneseq
    %v391 = vand.u32 %v390, 127
    %vm392 = vcmp.eq.s32.totalorder %v374, %v391
    %vm393 = vcmp.eq.s32.totalorder %v375, %v391
    %vm394 = vcmp.eq.s32.totalorder %v376, %v391
    %vm395 = vcmp.eq.s32.totalorder %v377, %v391
    %vm396 = vcmp.eq.s32.totalorder %v378, %v391
    %vm397 = vcmp.eq.s32.totalorder %v379, %v391
    %vm398 = vcmp.eq.s32.totalorder %v380, %v391
    %vm399 = vcmp.eq.s32.totalorder %v381, %v391
    %vm400 = vcmp.eq.s32.totalorder %v382, %v391
    %vm401 = vcmp.eq.s32.totalorder %v383, %v391
    %vm402 = vcmp.eq.s32.totalorder %v384, %v391
    %vm403 = vcmp.eq.s32.totalorder %v385, %v391
    %vm404 = vcmp.eq.s32.totalorder %v386, %v391
    %vm405 = vcmp.eq.s32.totalorder %v387, %v391
    %vm406 = vcmp.eq.s32.totalorder %v388, %v391
    %vm407 = vcmp.eq.s32.totalorder %v389, %v391
    %409 = vset.pattern.permute.xlu0 0
    %410 = vperm.xlu0 %409, %v342
    %v411 = vpop.permute.xlu0 %410
    %414 = vset.pattern.permute.xlu0 0
    %415 = vperm.xlu0 %414, %v344
    %v416 = vpop.permute.xlu0 %415
    %419 = vset.pattern.permute.xlu0 0
    %420 = vperm.xlu0 %419, %v346
    %v421 = vpop.permute.xlu0 %420
    %424 = vset.pattern.permute.xlu0 0
    %425 = vperm.xlu0 %424, %v348
    %v426 = vpop.permute.xlu0 %425
    %429 = vset.pattern.permute.xlu0 0
    %430 = vperm.xlu0 %429, %v350
    %v431 = vpop.permute.xlu0 %430
    %434 = vset.pattern.permute.xlu0 0
    %435 = vperm.xlu0 %434, %v352
    %v436 = vpop.permute.xlu0 %435
    %439 = vset.pattern.permute.xlu0 0
    %440 = vperm.xlu0 %439, %v354
    %v441 = vpop.permute.xlu0 %440
    %444 = vset.pattern.permute.xlu0 0
    %445 = vperm.xlu0 %444, %v356
    %v446 = vpop.permute.xlu0 %445
    %449 = vset.pattern.permute.xlu0 0
    %450 = vperm.xlu0 %449, %v358
    %v451 = vpop.permute.xlu0 %450
    %454 = vset.pattern.permute.xlu0 0
    %455 = vperm.xlu0 %454, %v360
    %v456 = vpop.permute.xlu0 %455
    %459 = vset.pattern.permute.xlu0 0
    %460 = vperm.xlu0 %459, %v362
    %v461 = vpop.permute.xlu0 %460
    %464 = vset.pattern.permute.xlu0 0
    %465 = vperm.xlu0 %464, %v364
    %v466 = vpop.permute.xlu0 %465
    %469 = vset.pattern.permute.xlu0 0
    %470 = vperm.xlu0 %469, %v366
    %v471 = vpop.permute.xlu0 %470
    %474 = vset.pattern.permute.xlu0 0
    %475 = vperm.xlu0 %474, %v368
    %v476 = vpop.permute.xlu0 %475
    %479 = vset.pattern.permute.xlu0 0
    %480 = vperm.xlu0 %479, %v370
    %v481 = vpop.permute.xlu0 %480
    %484 = vset.pattern.permute.xlu0 0
    %485 = vperm.xlu0 %484, %v372
    %v486 = vpop.permute.xlu0 %485
    %v488 = vsel %vm392, %v411, 0.0
    %v489 = vsel %vm393, %v416, 0.0
    %v490 = vsel %vm394, %v421, 0.0
    %v491 = vsel %vm395, %v426, 0.0
    %v492 = vsel %vm396, %v431, 0.0
    %v493 = vsel %vm397, %v436, 0.0
    %v494 = vsel %vm398, %v441, 0.0
    %v495 = vsel %vm399, %v446, 0.0
    %v496 = vsel %vm400, %v451, 0.0
    %v497 = vsel %vm401, %v456, 0.0
    %v498 = vsel %vm402, %v461, 0.0
    %v499 = vsel %vm403, %v466, 0.0
    %v500 = vsel %vm404, %v471, 0.0
    %v501 = vsel %vm405, %v476, 0.0
    %v502 = vsel %vm406, %v481, 0.0
    %v503 = vsel %vm407, %v486, 0.0
    %v504 = vadd.f32 %v488, %v489
    %v505 = vadd.f32 %v504, %v490
    %v506 = vadd.f32 %v505, %v491
    %v507 = vadd.f32 %v506, %v492
    %v508 = vadd.f32 %v507, %v493
    %v509 = vadd.f32 %v508, %v494
    %v510 = vadd.f32 %v509, %v495
    %v511 = vadd.f32 %v510, %v496
    %v512 = vadd.f32 %v511, %v497
    %v513 = vadd.f32 %v512, %v498
    %v514 = vadd.f32 %v513, %v499
    %v515 = vadd.f32 %v514, %v500
    %v516 = vadd.f32 %v515, %v501
    %v517 = vadd.f32 %v516, %v502
    %v518 = vadd.f32 %v517, %v503
    %v519 = vrot.slane %v518, 4
    %v520 = vadd.f32 %v518, %v519
    %v521 = vrot.slane %v520, 2
    %v522 = vadd.f32 %v520, %v521
    %v523 = vrot.slane %v522, 1
    %v524 = vadd.f32 %v522, %v523
    %525 = vst [vmem:[#allocation3] sm:$0x1] %v524
    // Predicated region
    $region14: #{tpu_custom_call.1} parent=1 // pred_check
      _
    $region15: #{tpu_custom_call.1} parent=1 // pred_check_branch
      %527 = sbr.rel (0) target = $region17
    $region16: #{tpu_custom_call.1} parent=1 // pred_region
      %s529 = ssub.s32 16, 16
      %530 = vsyncadd [#allocation4], %s529
      %s532 = sshll.u32 [#allocation3], 4
      %s533 = int_to_ptr.vmem [resolvable:$true] %s532
      %535 = dma.vmem_to_hbm [thread:$0]  %s533, 16, %s3, [#allocation4]
    $region17: #{tpu_custom_call.1} parent=1 // pred_fallthru
      _
    // Predicated region
    $region18: #{tpu_custom_call.1} parent=1 // pred_check
      _
    $region19: #{tpu_custom_call.1} parent=1 // pred_check_branch
      %537 = sbr.rel (0) target = $region21
    $region20: #{tpu_custom_call.1} parent=1 // pred_region
      %538 = dma.done [#allocation4], 16
    $region21: #{tpu_custom_call.1} parent=1 // pred_fallthru
      _
    %539 = vsyncpa [#allocation4], 1

</llo_original>
